<compile_context>
chip_gen: v5e
topology: v5e:2x2
jax: 0.10.0
libtpu: 0.0.40
codegen_flags: <defaults>
</compile_context>

<pallas_src>
import numpy as np
import jax
import jax.numpy as jnp
from jax import lax
from jax.experimental import pallas as pl
from jax.experimental.pallas import tpu as pltpu

# ---------------- configuration (small, consistent with the module) ----------
BATCH = 8
NUM_DENSE = 2                      # dataset.num_dense_feats
NUM_SPARSE = 3                     # dataset.num_sparse_feats
FIELD_DIMS = [1, 1, 5, 7, 9]       # dense fields first, then sparse fields
EMB_DIM = 8                        # args.embedding_dim
BLOCK_IN = 32                      # args.block_in_dim
BLOCK_OUT = 32                     # == block_in_dim in the module
NUM_BLOCKS = 2                     # args.num_block
NUM_BLOCK_TYPES = 3                # len(block_keys) (synthetic candidate set)
NUM_INIT_NODE = 2                  # dense node + sparse node
WEIGHTS_REG = 1e-4                 # args.weights_reg

_SPARSE_OFFSETS = tuple(int(v) for v in
                        (0, *np.cumsum(FIELD_DIMS)[NUM_DENSE:-1]))  # module formula
_TABLE_ROWS = int(sum(FIELD_DIMS))
DENSE_DIM = NUM_DENSE * EMB_DIM                      # flattened dense node width
SPARSE_DIM = NUM_SPARSE * EMB_DIM                    # flattened sparse node width
EMB_IN_DIM = NUM_DENSE + NUM_SPARSE * _TABLE_ROWS    # width of the fused emb input
EMB_OUT_DIM = DENSE_DIM + SPARSE_DIM                 # width of the fused emb output
SLAB_LANES = 128                                     # lane-dense param slab width

_ACTS = (jax.nn.relu, lambda v: v, jnp.tanh)   # one activation per candidate op


# ---------------- deterministic parameter / arch construction ----------------
def _node_flat_dim(node_idx):
    if node_idx == 0:
        return DENSE_DIM            # raw_dense_linear
    if node_idx == 1:
        return SPARSE_DIM           # raw_sparse_linear
    return BLOCK_OUT                # block output node


def make_arch_params():
    """Mirror _initialize() + binarize()/proximal_step(): one-hot per segment."""
    rng = np.random.RandomState(0)
    arch = []
    for i in range(NUM_BLOCKS):
        npn = NUM_INIT_NODE + i
        n = 2 * npn + NUM_BLOCK_TYPES
        alphas = np.ones(n) / 2 + rng.randn(n) * 0.001
        vals = np.zeros(n, dtype=np.float32)
        chosen = []
        for j in range(2):
            seg = alphas[j * npn:(j + 1) * npn]
            node = next(x for x in np.argsort(-seg) if x not in chosen)
            chosen.append(node)
            vals[j * npn + node] = 1.0
        vals[2 * npn + int(np.argmax(alphas[-NUM_BLOCK_TYPES:]))] = 1.0
        arch.append(vals)
    return arch


def make_params(key, arch_params):
    keys = jax.random.split(key, 4 + NUM_BLOCKS)
    # embedding table: xavier_uniform_
    bound = np.sqrt(6.0 / (_TABLE_ROWS + EMB_DIM))
    table = jax.random.uniform(keys[0], (_TABLE_ROWS, EMB_DIM),
                               jnp.float32, -bound, bound)
    # classifier: nn.Linear(num_blocks * block_out, 1)
    cin = NUM_BLOCKS * BLOCK_OUT
    cb = 1.0 / np.sqrt(cin)
    cls_w = jax.random.uniform(keys[1], (cin, 1), jnp.float32, -cb, cb)
    cls_b = jax.random.uniform(keys[2], (1, 1), jnp.float32, -cb, cb)

    blocks = []
    for i in range(NUM_BLOCKS):
        npn = NUM_INIT_NODE + i
        w = arch_params[i]
        n1 = int(np.argmax(w[:npn]))
        n2 = int(np.argmax(w[npn:2 * npn]))
        d1, d2 = _node_flat_dim(n1), _node_flat_dim(n2)
        bk = jax.random.split(keys[4 + i], 5)
        s1, s2, sh = 1.0 / np.sqrt(d1), 1.0 / np.sqrt(d2), 1.0 / np.sqrt(BLOCK_IN)
        a = jax.random.uniform(bk[0], (NUM_BLOCK_TYPES, d1, BLOCK_IN),
                               jnp.float32, -s1, s1)
        b = jax.random.uniform(bk[1], (NUM_BLOCK_TYPES, d2, BLOCK_IN),
                               jnp.float32, -s2, s2)
        c = jax.random.uniform(bk[2], (NUM_BLOCK_TYPES, 1, BLOCK_IN),
                               jnp.float32, -sh, sh)
        ww = jax.random.uniform(bk[3], (NUM_BLOCK_TYPES, BLOCK_IN, BLOCK_OUT),
                                jnp.float32, -sh, sh)
        d = jax.random.uniform(bk[4], (NUM_BLOCK_TYPES, 1, BLOCK_OUT),
                               jnp.float32, -sh, sh)
        blocks.append((a, b, c, ww, d))

    return {"embedding_table": table, "cls_w": cls_w, "cls_b": cls_b,
            "blocks": blocks}


def _select_arch(arch_params_np):
    """Trace-time decode of the binarized arch (also runs forward()'s asserts)."""
    sel = []
    for i in range(NUM_BLOCKS):
        w = np.asarray(arch_params_np[i], dtype=np.float32)
        npn = NUM_INIT_NODE + i
        assert np.isclose(w[:npn].sum(), 1.0)
        assert np.isclose(w[npn:2 * npn].sum(), 1.0)
        assert np.isclose(w[-NUM_BLOCK_TYPES:].sum(), 1.0)
        n1 = int(np.argmax(w[:npn]));             w1 = float(w[n1])
        n2 = int(np.argmax(w[npn:2 * npn]));      w2 = float(w[npn + n2])
        k = int(np.argmax(w[-NUM_BLOCK_TYPES:])); wk = float(w[2 * npn + k])
        sel.append((n1, w1, n2, w2, k, wk))
    return tuple(sel)


# ---------------- param packing (setup time, one lane-dense slab) -------------
def pack_params(params, arch_sel):
    """Pack everything the kernel needs into one (rows, 128) f32 slab.

    Each piece is padded to a multiple of 8 rows (sublane aligned) and 128
    lanes so in-kernel static slices never relayout.  Returns (slab, layout)
    with layout[name] = (row_offset, n_rows, n_cols).
    """
    pieces, layout = [], {}
    row = 0

    def add(name, mat):
        nonlocal row
        mat = jnp.asarray(mat, jnp.float32)
        r, c = mat.shape
        layout[name] = (row, r, c)
        pad_r = (-r) % 8
        pieces.append(jnp.pad(mat, ((0, pad_r), (0, SLAB_LANES - c))))
        row += r + pad_r

    table = params["embedding_table"].astype(jnp.float32)
    E = EMB_DIM
    # Block-diagonal embedding operator so that
    #   [raw_dense | one_hot(sparse ids)] @ emb_bd == [dense_flat | sparse_flat]
    # NOTE: dense fields are assumed to occupy table rows 0..NUM_DENSE-1
    # (matches the module's dense_indexes = range(num_dense_feats)).
    dense_bd = jnp.zeros((NUM_DENSE, EMB_OUT_DIM), jnp.float32)
    for f in range(NUM_DENSE):
        dense_bd = dense_bd.at[f, f * E:(f + 1) * E].set(table[f])
    sparse_bd = [jnp.pad(table, ((0, 0),
                                 ((NUM_DENSE + f) * E, (NUM_SPARSE - 1 - f) * E)))
                 for f in range(NUM_SPARSE)]
    add("emb_bd", jnp.concatenate([dense_bd] + sparse_bd, axis=0))   # (EMB_IN_DIM, 40)

    # Only the arch-selected candidate op per block is shipped.
    for i in range(NUM_BLOCKS):
        n1, w1, n2, w2, k, wk = arch_sel[i]
        a, b, c, ww, d = params["blocks"][i]
        add(f"w1_{i}", jnp.concatenate([a[k], b[k]], axis=0))   # (d1+d2, BLOCK_IN)
        add(f"b1_{i}", c[k])                                    # (1, BLOCK_IN)
        add(f"w2_{i}", ww[k])                                   # (BLOCK_IN, BLOCK_OUT)
        add(f"b2_{i}", d[k])                                    # (1, BLOCK_OUT)

    add("cls_w", params["cls_w"])                               # (NB*BLOCK_OUT, 1)
    add("cls_b", params["cls_b"])                               # (1, 1)

    return jnp.concatenate(pieces, axis=0), layout


# ---------------- the single fused Pallas kernel ------------------------------
def build_fused_kernel(arch_sel, layout):
    def kernel(slab_ref, dense_ref, sparse_ref, out_ref):
        raw_dense = dense_ref[...]                 # (B, Fd)  f32
        sparse_idx = sparse_ref[...]               # (B, Fs)  i32 (raw ids)
        B = raw_dense.shape[0]

        # --- fused embedding layer -----------------------------------------
        # One-hot over lane-concatenated per-field segments; the static
        # per-field sparse offsets are folded into the compare target.
        cols = lax.broadcasted_iota(jnp.int32, (B, NUM_SPARSE * _TABLE_ROWS), 1)
        onehot = jnp.zeros((B, NUM_SPARSE * _TABLE_ROWS), jnp.float32)
        for f in range(NUM_SPARSE):
            tgt = sparse_idx[:, f:f + 1] + (f * _TABLE_ROWS + _SPARSE_OFFSETS[f])
            onehot = onehot + (cols == tgt).astype(jnp.float32)

        emb_in = jnp.concatenate([raw_dense, onehot], axis=1)   # (B, EMB_IN_DIM)
        r0, nr, nc = layout["emb_bd"]
        emb_flat = jnp.dot(emb_in, slab_ref[r0:r0 + nr, 0:nc],
                           preferred_element_type=jnp.float32)  # (B, 40)

        dense_flat = emb_flat[:, 0:DENSE_DIM]                        # (B, Fd*E)
        sparse_flat = emb_flat[:, DENSE_DIM:DENSE_DIM + SPARSE_DIM]  # (B, Fs*E)

        # --- Frobenius norms: one full reduction each ------------------------
        # NOTE: regs is batch-global (matches torch.norm over the whole tensor).
        ss_dense = jnp.sum(dense_flat * dense_flat)
        ss_sparse = jnp.sum(sparse_flat * sparse_flat)
        regs = jnp.float32(WEIGHTS_REG) * (jnp.sqrt(ss_dense) + jnp.sqrt(ss_sparse))

        def node(idx, block_outs):
            if idx == 0:
                return dense_flat
            if idx == 1:
                return sparse_flat
            return block_outs[idx - 2]

        # --- MixedBlocks: only the statically-selected candidate op runs -----
        block_outs = []
        for i in range(NUM_BLOCKS):
            n1, w1, n2, w2, k, wk = arch_sel[i]
            x1 = node(n1, block_outs)
            x2 = node(n2, block_outs)
            if w1 != 1.0:            # arch node weight (1.0 after binarize)
                x1 = jnp.float32(w1) * x1
            if w2 != 1.0:
                x2 = jnp.float32(w2) * x2
            if (n1, n2) == (0, 1) and w1 == 1.0 and w2 == 1.0:
                x_cat = emb_flat     # already lane-concatenated [dense | sparse]
            else:
                x_cat = jnp.concatenate([x1, x2], axis=1)

            rw1, nw1, cw1 = layout[f"w1_{i}"]
            rb1, _, cb1 = layout[f"b1_{i}"]
            rw2, nw2, cw2 = layout[f"w2_{i}"]
            rb2, _, cb2 = layout[f"b2_{i}"]

            h = (jnp.dot(x_cat, slab_ref[rw1:rw1 + nw1, 0:cw1],
                         preferred_element_type=jnp.float32)
                 + slab_ref[rb1:rb1 + 1, 0:cb1])
            h = _ACTS[k](h)
            y = (jnp.dot(h, slab_ref[rw2:rw2 + nw2, 0:cw2],
                         preferred_element_type=jnp.float32)
                 + slab_ref[rb2:rb2 + 1, 0:cb2])
            if wk != 1.0:            # arch type weight (1.0 after binarize)
                y = jnp.float32(wk) * y
            block_outs.append(y)

        # --- classifier over the concatenated block outputs ------------------
        y_cat = jnp.concatenate(block_outs, axis=1)              # (B, NB*BLOCK_OUT)
        rcw, ncw, _ = layout["cls_w"]
        rcb, _, _ = layout["cls_b"]
        logits = (jnp.dot(y_cat, slab_ref[rcw:rcw + ncw, 0:1],
                          preferred_element_type=jnp.float32)
                  + slab_ref[rcb:rcb + 1, 0:1])                  # (B, 1)

        # --- single lane-dense output tile: col 0 = logits, col 1 = regs -----
        ocols = lax.broadcasted_iota(jnp.int32, (B, SLAB_LANES), 1)
        logits_b = jnp.broadcast_to(logits, (B, SLAB_LANES))
        regs_b = jnp.broadcast_to(jnp.reshape(regs, (1, 1)), (B, SLAB_LANES))
        out_ref[...] = jnp.where(ocols == 0, logits_b,
                                 jnp.where(ocols == 1, regs_b, jnp.float32(0.0)))

    return kernel


# ---------------- DynamicNetwork.forward --------------------------------------
def dynamic_network_forward(raw_dense, raw_sparse, packed_slab, layout, arch_sel):
    kernel = build_fused_kernel(arch_sel, layout)
    B = raw_dense.shape[0]
    vmem = pl.BlockSpec(memory_space=pltpu.MemorySpace.VMEM)
    out = pl.pallas_call(
        kernel,
        out_shape=jax.ShapeDtypeStruct((B, SLAB_LANES), jnp.float32),
        in_specs=[vmem, vmem, vmem],
        out_specs=vmem,
        # TODO(synk): at production batch add grid=(B//TB,) with
        # dimension_semantics=("parallel",) so v7x's two TensorCores are used.
    )(packed_slab, raw_dense.astype(jnp.float32), raw_sparse.astype(jnp.int32))
    logits = out[:, 0:1]
    regs = out[0, 1]
    return logits, regs


# ---------------- main --------------------------------------------------------
if __name__ == "__main__":
    key = jax.random.PRNGKey(0)
    k_in, k_sp, k_par = jax.random.split(key, 3)

    raw_dense = jax.random.uniform(k_in, (BATCH, NUM_DENSE), jnp.float32)
    sparse_cols = []
    sk = jax.random.split(k_sp, NUM_SPARSE)
    for j in range(NUM_SPARSE):
        sparse_cols.append(jax.random.randint(
            sk[j], (BATCH,), 0, FIELD_DIMS[NUM_DENSE + j], dtype=jnp.int32))
    raw_sparse = jnp.stack(sparse_cols, axis=1)

    arch_params_np = make_arch_params()
    arch_sel = _select_arch(arch_params_np)
    params = make_params(k_par, arch_params_np)
    packed_slab, layout = pack_params(params, arch_sel)   # setup-time packing

    fwd = jax.jit(lambda rd, rs, slab: dynamic_network_forward(
        rd, rs, slab, layout, arch_sel))
    logits, regs = fwd(raw_dense, raw_sparse, packed_slab)
    logits = jax.block_until_ready(logits)
    regs = jax.block_until_ready(regs)

    assert logits.shape == (BATCH, 1)
    assert bool(jnp.all(jnp.isfinite(logits))) and bool(jnp.isfinite(regs))
    print("KERNEL_OK")
</pallas_src>

<mosaic_0001>
module attributes {stable_mosaic.version = 11 : i64} {
  func.func @kernel(%arg0: memref<336x128xf32, #tpu.memory_space<vmem>>, %arg1: memref<8x2xf32, #tpu.memory_space<vmem>>, %arg2: memref<8x3xi32, #tpu.memory_space<vmem>>, %arg3: memref<8x128xf32, #tpu.memory_space<vmem>>) attributes {dimension_semantics = [], scalar_prefetch = 0 : i64, scratch_operands = 0 : i64, tpu.core_type = #tpu.core_type<tc>} {
    %c0 = arith.constant 0 : index
    %c0_0 = arith.constant 0 : index
    %0 = vector.load %arg1[%c0, %c0_0] : memref<8x2xf32, #tpu.memory_space<vmem>>, vector<8x2xf32>
    %c0_1 = arith.constant 0 : index
    %c0_2 = arith.constant 0 : index
    %1 = vector.load %arg2[%c0_1, %c0_2] : memref<8x3xi32, #tpu.memory_space<vmem>>, vector<8x3xi32>
    %2 = tpu.iota {dimensions = array<i32: 1>} : vector<8x69xi32>
    %cst = arith.constant 0.000000e+00 : f32
    %3 = vector.broadcast %cst : f32 to vector<8x69xf32>
    %4 = vector.extract_strided_slice %1 {offsets = [0, 0], sizes = [8, 1], strides = [1, 1]} : vector<8x3xi32> to vector<8x1xi32>
    %c0_i32 = arith.constant 0 : i32
    %5 = vector.broadcast %c0_i32 : i32 to vector<8x1xi32>
    %6 = arith.addi %4, %5 : vector<8x1xi32>
    %7 = vector.broadcast %6 : vector<8x1xi32> to vector<8x69xi32>
    %8 = arith.cmpi eq, %2, %7 : vector<8x69xi32>
    %9 = arith.extui %8 : vector<8x69xi1> to vector<8x69xi32>
    %10 = arith.sitofp %9 : vector<8x69xi32> to vector<8x69xf32>
    %11 = arith.addf %3, %10 : vector<8x69xf32>
    %12 = vector.extract_strided_slice %1 {offsets = [0, 1], sizes = [8, 1], strides = [1, 1]} : vector<8x3xi32> to vector<8x1xi32>
    %c30_i32 = arith.constant 30 : i32
    %13 = vector.broadcast %c30_i32 : i32 to vector<8x1xi32>
    %14 = arith.addi %12, %13 : vector<8x1xi32>
    %15 = vector.broadcast %14 : vector<8x1xi32> to vector<8x69xi32>
    %16 = arith.cmpi eq, %2, %15 : vector<8x69xi32>
    %17 = arith.extui %16 : vector<8x69xi1> to vector<8x69xi32>
    %18 = arith.sitofp %17 : vector<8x69xi32> to vector<8x69xf32>
    %19 = arith.addf %11, %18 : vector<8x69xf32>
    %20 = vector.extract_strided_slice %1 {offsets = [0, 2], sizes = [8, 1], strides = [1, 1]} : vector<8x3xi32> to vector<8x1xi32>
    %c60_i32 = arith.constant 60 : i32
    %21 = vector.broadcast %c60_i32 : i32 to vector<8x1xi32>
    %22 = arith.addi %20, %21 : vector<8x1xi32>
    %23 = vector.broadcast %22 : vector<8x1xi32> to vector<8x69xi32>
    %24 = arith.cmpi eq, %2, %23 : vector<8x69xi32>
    %25 = arith.extui %24 : vector<8x69xi1> to vector<8x69xi32>
    %26 = arith.sitofp %25 : vector<8x69xi32> to vector<8x69xf32>
    %27 = arith.addf %19, %26 : vector<8x69xf32>
    %28 = tpu.concatenate %0, %27 in 1 : vector<8x2xf32>, vector<8x69xf32> -> vector<8x71xf32>
    %c0_3 = arith.constant 0 : index
    %c0_4 = arith.constant 0 : index
    %29 = vector.load %arg0[%c0_3, %c0_4] : memref<336x128xf32, #tpu.memory_space<vmem>>, vector<71x40xf32>
    %cst_5 = arith.constant dense<0.000000e+00> : vector<8x40xf32>
    %30 = tpu.matmul %28, %29, %cst_5 {dimension_numbers = #tpu.dot_dimension_numbers<[1], [0], [0], [1], [0, 0, 1, 1], [], []>} : vector<8x71xf32>, vector<71x40xf32>, vector<8x40xf32> -> vector<8x40xf32>
    %31 = vector.extract_strided_slice %30 {offsets = [0, 0], sizes = [8, 16], strides = [1, 1]} : vector<8x40xf32> to vector<8x16xf32>
    %32 = vector.extract_strided_slice %30 {offsets = [0, 16], sizes = [8, 24], strides = [1, 1]} : vector<8x40xf32> to vector<8x24xf32>
    %33 = arith.mulf %31, %31 : vector<8x16xf32>
    %34 = vector.shape_cast %33 : vector<8x16xf32> to vector<1x8x16xf32>
    %cst_6 = arith.constant dense<0.000000e+00> : vector<1xf32>
    %35 = vector.multi_reduction <add>, %34, %cst_6 [1, 2] : vector<1x8x16xf32> to vector<1xf32>
    %36 = vector.shape_cast %35 : vector<1xf32> to vector<1x1x1xf32>
    %37 = vector.extract %36[0, 0, 0] : f32 from vector<1x1x1xf32>
    %38 = arith.mulf %32, %32 : vector<8x24xf32>
    %39 = vector.shape_cast %38 : vector<8x24xf32> to vector<1x8x24xf32>
    %cst_7 = arith.constant dense<0.000000e+00> : vector<1xf32>
    %40 = vector.multi_reduction <add>, %39, %cst_7 [1, 2] : vector<1x8x24xf32> to vector<1xf32>
    %41 = vector.shape_cast %40 : vector<1xf32> to vector<1x1x1xf32>
    %42 = vector.extract %41[0, 0, 0] : f32 from vector<1x1x1xf32>
    %43 = math.sqrt %37 : f32
    %44 = math.sqrt %42 : f32
    %45 = arith.addf %43, %44 : f32
    %cst_8 = arith.constant 9.99999974E-5 : f32
    %46 = arith.mulf %cst_8, %45 : f32
    %c72 = arith.constant 72 : index
    %c0_9 = arith.constant 0 : index
    %47 = vector.load %arg0[%c72, %c0_9] : memref<336x128xf32, #tpu.memory_space<vmem>>, vector<40x32xf32>
    %cst_10 = arith.constant dense<0.000000e+00> : vector<8x32xf32>
    %48 = tpu.matmul %30, %47, %cst_10 {dimension_numbers = #tpu.dot_dimension_numbers<[1], [0], [0], [1], [0, 0, 1, 1], [], []>} : vector<8x40xf32>, vector<40x32xf32>, vector<8x32xf32> -> vector<8x32xf32>
    %c112 = arith.constant 112 : index
    %c0_11 = arith.constant 0 : index
    %49 = vector.load %arg0[%c112, %c0_11] : memref<336x128xf32, #tpu.memory_space<vmem>>, vector<1x32xf32>
    %50 = vector.broadcast %49 : vector<1x32xf32> to vector<8x32xf32>
    %51 = arith.addf %48, %50 : vector<8x32xf32>
    %cst_12 = arith.constant 0.000000e+00 : f32
    %52 = vector.broadcast %cst_12 : f32 to vector<8x32xf32>
    %53 = arith.maximumf %51, %52 : vector<8x32xf32>
    %c120 = arith.constant 120 : index
    %c0_13 = arith.constant 0 : index
    %54 = vector.load %arg0[%c120, %c0_13] : memref<336x128xf32, #tpu.memory_space<vmem>>, vector<32x32xf32>
    %cst_14 = arith.constant dense<0.000000e+00> : vector<8x32xf32>
    %55 = tpu.matmul %53, %54, %cst_14 {dimension_numbers = #tpu.dot_dimension_numbers<[1], [0], [0], [1], [0, 0, 1, 1], [], []>} : vector<8x32xf32>, vector<32x32xf32>, vector<8x32xf32> -> vector<8x32xf32>
    %c152 = arith.constant 152 : index
    %c0_15 = arith.constant 0 : index
    %56 = vector.load %arg0[%c152, %c0_15] : memref<336x128xf32, #tpu.memory_space<vmem>>, vector<1x32xf32>
    %57 = vector.broadcast %56 : vector<1x32xf32> to vector<8x32xf32>
    %58 = arith.addf %55, %57 : vector<8x32xf32>
    %59 = tpu.concatenate %58, %32 in 1 : vector<8x32xf32>, vector<8x24xf32> -> vector<8x56xf32>
    %c160 = arith.constant 160 : index
    %c0_16 = arith.constant 0 : index
    %60 = vector.load %arg0[%c160, %c0_16] : memref<336x128xf32, #tpu.memory_space<vmem>>, vector<56x32xf32>
    %cst_17 = arith.constant dense<0.000000e+00> : vector<8x32xf32>
    %61 = tpu.matmul %59, %60, %cst_17 {dimension_numbers = #tpu.dot_dimension_numbers<[1], [0], [0], [1], [0, 0, 1, 1], [], []>} : vector<8x56xf32>, vector<56x32xf32>, vector<8x32xf32> -> vector<8x32xf32>
    %c216 = arith.constant 216 : index
    %c0_18 = arith.constant 0 : index
    %62 = vector.load %arg0[%c216, %c0_18] : memref<336x128xf32, #tpu.memory_space<vmem>>, vector<1x32xf32>
    %63 = vector.broadcast %62 : vector<1x32xf32> to vector<8x32xf32>
    %64 = arith.addf %61, %63 : vector<8x32xf32>
    %c224 = arith.constant 224 : index
    %c0_19 = arith.constant 0 : index
    %65 = vector.load %arg0[%c224, %c0_19] : memref<336x128xf32, #tpu.memory_space<vmem>>, vector<32x32xf32>
    %cst_20 = arith.constant dense<0.000000e+00> : vector<8x32xf32>
    %66 = tpu.matmul %64, %65, %cst_20 {dimension_numbers = #tpu.dot_dimension_numbers<[1], [0], [0], [1], [0, 0, 1, 1], [], []>} : vector<8x32xf32>, vector<32x32xf32>, vector<8x32xf32> -> vector<8x32xf32>
    %c256 = arith.constant 256 : index
    %c0_21 = arith.constant 0 : index
    %67 = vector.load %arg0[%c256, %c0_21] : memref<336x128xf32, #tpu.memory_space<vmem>>, vector<1x32xf32>
    %68 = vector.broadcast %67 : vector<1x32xf32> to vector<8x32xf32>
    %69 = arith.addf %66, %68 : vector<8x32xf32>
    %70 = tpu.concatenate %58, %69 in 1 : vector<8x32xf32>, vector<8x32xf32> -> vector<8x64xf32>
    %c264 = arith.constant 264 : index
    %c0_22 = arith.constant 0 : index
    %71 = vector.load %arg0[%c264, %c0_22] : memref<336x128xf32, #tpu.memory_space<vmem>>, vector<64x1xf32>
    %cst_23 = arith.constant dense<0.000000e+00> : vector<8x1xf32>
    %72 = tpu.matmul %70, %71, %cst_23 {dimension_numbers = #tpu.dot_dimension_numbers<[1], [0], [0], [1], [0, 0, 1, 1], [], []>} : vector<8x64xf32>, vector<64x1xf32>, vector<8x1xf32> -> vector<8x1xf32>
    %c328 = arith.constant 328 : index
    %c0_24 = arith.constant 0 : index
    %73 = vector.load %arg0[%c328, %c0_24] : memref<336x128xf32, #tpu.memory_space<vmem>>, vector<1x1xf32>
    %74 = vector.broadcast %73 : vector<1x1xf32> to vector<8x1xf32>
    %75 = arith.addf %72, %74 : vector<8x1xf32>
    %76 = tpu.iota {dimensions = array<i32: 1>} : vector<8x128xi32>
    %77 = vector.shape_cast %75 : vector<8x1xf32> to vector<8x1xf32>
    %78 = vector.broadcast %77 : vector<8x1xf32> to vector<8x128xf32>
    %79 = vector.broadcast %46 : f32 to vector<1x1xf32>
    %80 = vector.shape_cast %79 : vector<1x1xf32> to vector<1x1xf32>
    %81 = vector.broadcast %80 : vector<1x1xf32> to vector<8x128xf32>
    %c0_i32_25 = arith.constant 0 : i32
    %82 = vector.broadcast %c0_i32_25 : i32 to vector<8x128xi32>
    %83 = arith.cmpi eq, %76, %82 : vector<8x128xi32>
    %c1_i32 = arith.constant 1 : i32
    %84 = vector.broadcast %c1_i32 : i32 to vector<8x128xi32>
    %85 = arith.cmpi eq, %76, %84 : vector<8x128xi32>
    %cst_26 = arith.constant 0.000000e+00 : f32
    %86 = vector.broadcast %cst_26 : f32 to vector<8x128xf32>
    %87 = arith.select %85, %81, %86 : vector<8x128xi1>, vector<8x128xf32>
    %88 = arith.select %83, %78, %87 : vector<8x128xi1>, vector<8x128xf32>
    %c0_27 = arith.constant 0 : index
    %c0_28 = arith.constant 0 : index
    %89 = vector.load %arg3[%c0_27, %c0_28] : memref<8x128xf32, #tpu.memory_space<vmem>>, vector<8x128xf32>
    tpu.vector_store %arg3[%c0_27, %c0_28], %88 {strides = array<i32>} : memref<8x128xf32, #tpu.memory_space<vmem>>, vector<8x128xf32>,
    return
  }
}

</mosaic_0001>

<llo_original>
// kernel: _lambda_.1
$region0: #{_lambda_.1}
  #allocation0 [shape = 'u32[]', space=smem, size = 0x4, offset = 0x4, fixed_abs, tag = 'smem constant byte address 0x4 - core index']
  #allocation1 [shape = 'u32[72,128]{1,0:T(1,128)}', space=vmem, size = 0x9000, scoped, tag = 'internal scratch']
  %s0 = inlined_call_operand.hbm [shape: f32[336,128], index: 0, kind: input, shape index: {}]
  %s1 = inlined_call_operand.vmem [shape: f32[8,2], index: 1, kind: input, shape index: {}]
  %s2 = inlined_call_operand.vmem [shape: s32[8,3], index: 2, kind: input, shape index: {}]
  %s3 = inlined_call_operand.vmem [shape: f32[8,128], index: 3, kind: output, shape index: {}]
  %s4 = sld [smem:[#allocation0]]
  $region26: #{_lambda_.1} parent=0
    _
  %s6 = ssub.s32 1, %s4
  %s7 = scalar_select 0, %s6, %s4
  $region1: #{_lambda_.1} parent=0
    #allocation2 [shape = 'u8[172032]{0}', space=vmem, size = 0x2a000, scoped, tag = 'input window, operand 0, single buffered']
    #allocation3 [shape = 's32[1]{0}', space=sflag, size = 0x4, scoped, tag = 'scoped memory for _lambda_.1']
    %8 = vsyncpa [#allocation3], 0
    // Predicated region
    $region2: #{_lambda_.1} parent=1 // pred_check
      _
    $region3: #{_lambda_.1} parent=1 // pred_check_branch
      %10 = sbr.rel (0) target = $region5
    $region4: #{_lambda_.1} parent=1 // pred_region
      %12 = vsyncadd [#allocation3], 0
      %s13 = sshll.u32 %s0, 4
      %s14 = int_to_ptr.hbm [resolvable:$true] %s13
      %s15 = sshll.u32 [#allocation2], 4
      %s16 = int_to_ptr.vmem [resolvable:$true] %s15
      %21 = dma.hbm_to_vmem [thread:$0]  %s14, 5376, %s16, [#allocation3], 128, 128, 8
    $region5: #{_lambda_.1} parent=1 // pred_fallthru
      _
    // Predicated region
    $region6: #{_lambda_.1} parent=1 // pred_check
      _
    $region7: #{_lambda_.1} parent=1 // pred_check_branch
      %23 = sbr.rel (0) target = $region9
    $region8: #{_lambda_.1} parent=1 // pred_region
      _
    $region9: #{_lambda_.1} parent=1 // pred_fallthru
      _
    // Predicated region
    $region10: #{_lambda_.1} parent=1 // pred_check
      _
    $region11: #{_lambda_.1} parent=1 // pred_check_branch
      %25 = sbr.rel (0) target = $region13
    $region12: #{_lambda_.1} parent=1 // pred_region
      _
    $region13: #{_lambda_.1} parent=1 // pred_fallthru
      _
    // Predicated region
    $region14: #{_lambda_.1} parent=1 // pred_check
      _
    $region15: #{_lambda_.1} parent=1 // pred_check_branch
      %27 = sbr.rel (0) target = $region17
    $region16: #{_lambda_.1} parent=1 // pred_region
      %29 = dma.done [#allocation3], 5376
    $region17: #{_lambda_.1} parent=1 // pred_fallthru
      _
    %v30 = vld [vmem:[%s1] sm:$0xff]
    %v31 = vld [vmem:[%s2] sm:$0xff]
    %v32 = vlaneseq
    %v33 = vand.u32 %v32, 127
    %34 = vset.pattern.permute.xlu0 0
    %35 = vperm.xlu0 %34, %v31
    %v36 = vpop.permute.xlu0 %35
    %vm37 = vcmp.eq.s32.totalorder %v33, %v36
    %v38 = vsel %vm37, 1, 0
    %v39 = vcvt.s32.f32 %v38
    %v40 = vadd.f32 %v39, 0.0
    %v41 = vadd.s32 %v31, 30
    %42 = vset.pattern.permute.xlu0 1
    %43 = vperm.xlu0 %42, %v41
    %v44 = vpop.permute.xlu0 %43
    %vm45 = vcmp.eq.s32.totalorder %v33, %v44
    %v46 = vsel %vm45, 1, 0
    %v47 = vcvt.s32.f32 %v46
    %v48 = vadd.f32 %v40, %v47
    %v49 = vadd.s32 %v31, 60
    %50 = vset.pattern.permute.xlu0 2
    %51 = vperm.xlu0 %50, %v49
    %v52 = vpop.permute.xlu0 %51
    %vm53 = vcmp.eq.s32.totalorder %v33, %v52
    %v54 = vsel %vm53, 1, 0
    %v55 = vcvt.s32.f32 %v54
    %v56 = vadd.f32 %v48, %v55
    %58 = vrot.lane.b32.xlu0 %v56, 2
    %v59 = vpop.permute.xlu0 %58
    %vm61 = vcmask 15360
    %v62 = vsel %vm61, %v30, %v59
    %v63 = vld [vmem:[#allocation2] sm:$0xff]
    %v64 = vld [vmem:[#allocation2 + $0x8] sm:$0xff]
    %v65 = vld [vmem:[#allocation2 + $0x10] sm:$0xff]
    %v66 = vld [vmem:[#allocation2 + $0x18] sm:$0xff]
    %v67 = vld [vmem:[#allocation2 + $0x20] sm:$0xff]
    %v68 = vld [vmem:[#allocation2 + $0x28] sm:$0xff]
    %v69 = vld [vmem:[#allocation2 + $0x30] sm:$0xff]
    %v70 = vld [vmem:[#allocation2 + $0x38] sm:$0xff]
    %v71 = vld [vmem:[#allocation2 + $0x40] sm:$0x7f]
    %vm72 = vcmask 580608
    %v74 = vsel %vm72, %v62, 0
    %vm76 = vcmask 1046528
    %v78 = vsel %vm76, %v71, 0
    %80 = vmatpush.msra.mxu0 0.0
    %81 = vmatpush.msra.mxu0 0.0
    %82 = vmatpush.msra.mxu0 0.0
    %83 = vmatpush.msra.mxu0 0.0
    %84 = vmatpush.msra.mxu0 0.0
    %85 = vmatpush.msra.mxu0 0.0
    %86 = vmatpush.msra.mxu0 0.0
    %87 = vmatpush.msra.mxu0 %v78
    %88 = vmatpush.msra.mxu0 %v70
    %89 = vmatpush.msra.mxu0 %v69
    %90 = vmatpush.msra.mxu0 %v68
    %91 = vmatpush.msra.mxu0 %v67
    %92 = vmatpush.msra.mxu0 %v66
    %93 = vmatpush.msra.mxu0 %v65
    %94 = vmatpush.msra.mxu0 %v64
    %95 = vmatpush.msra.mxu0 %v63
    %96 = vmatmul.f32.gmra.mxu0 %v74
    %v97 = vpop.f32.mrf.mxu0
    %v98 = vadd.f32 0.0, %v97
    %99 = vdwg.mxu0
    %v100 = vmul.f32 %v98, %v98
    %vm101 = vcmask 130048
    %v102 = vsel %vm101, %v100, 0.0
    %103 = vadd.xlane.f32.xlu0 %v102
    %v104 = vpop.xlane.xlu0 %103
    %v105 = vrot.slane %v104, 4
    %v106 = vadd.f32 %v104, %v105
    %v107 = vrot.slane %v106, 2
    %v108 = vadd.f32 %v106, %v107
    %v109 = vrot.slane %v108, 1
    %v110 = vadd.f32 %v108, %v109
    %s111 = vtos %v110
    %113 = vrot.lane.b32.xlu0 %v100, 112
    %v114 = vpop.permute.xlu0 %113
    %vm116 = vcmask 195584
    %v117 = vsel %vm116, %v114, 0.0
    %118 = vadd.xlane.f32.xlu0 %v117
    %v119 = vpop.xlane.xlu0 %118
    %v120 = vrot.slane %v119, 4
    %v121 = vadd.f32 %v119, %v120
    %v122 = vrot.slane %v121, 2
    %v123 = vadd.f32 %v121, %v122
    %v124 = vrot.slane %v123, 1
    %v125 = vadd.f32 %v123, %v124
    %s126 = vtos %v125
    %v127 = vstv %s111
    %v128 = vrsqrt.pop %v127
    %v129 = vmul.f32 %v128, %v127
    %v130 = vmul.f32 %v129, %v128
    %v131 = vmul.f32 0.5, %v130
    %v132 = vsub.f32 1.5, %v131
    %v133 = vmul.f32 %v128, %v132
    %v134 = vmul.f32 %v127, %v133
    %vm135 = vcmp.eq.f32.partialorder %v127, inf
    %v136 = vsel %vm135, %v127, %v134
    %vm137 = vcmp.eq.f32.partialorder %v127, 0.0
    %v138 = vand.u32 %v127, 2147483648
    %v139 = vsel %vm137, %v138, %v136
    %s140 = vtos %v139
    %v141 = vstv %s126
    %v142 = vrsqrt.pop %v141
    %v143 = vmul.f32 %v142, %v141
    %v144 = vmul.f32 %v143, %v142
    %v145 = vmul.f32 0.5, %v144
    %v146 = vsub.f32 1.5, %v145
    %v147 = vmul.f32 %v142, %v146
    %v148 = vmul.f32 %v141, %v147
    %vm149 = vcmp.eq.f32.partialorder %v141, inf
    %v150 = vsel %vm149, %v141, %v148
    %vm151 = vcmp.eq.f32.partialorder %v141, 0.0
    %v152 = vand.u32 %v141, 2147483648
    %v153 = vsel %vm151, %v152, %v150
    %s154 = vtos %v153
    %s155 = sadd.f32 %s140, %s154
    %s156 = smul.f32 %s155, 0.0001
    %v157 = vld [vmem:[#allocation2 + $0x48] sm:$0xff]
    %v158 = vld [vmem:[#allocation2 + $0x50] sm:$0xff]
    %v159 = vld [vmem:[#allocation2 + $0x58] sm:$0xff]
    %v160 = vld [vmem:[#allocation2 + $0x60] sm:$0xff]
    %v161 = vld [vmem:[#allocation2 + $0x68] sm:$0xff]
    %v162 = vld [vmem:[#allocation2 + $0x70] sm:$0x1]
    %v163 = vperm.slane %v162, 0
    %vm164 = vcmask 326656
    %v166 = vsel %vm164, %v98, 0
    %168 = vmatpush.msra.mxu0 0.0
    %169 = vmatpush.msra.mxu0 0.0
    %170 = vmatpush.msra.mxu0 0.0
    %171 = vmatpush.msra.mxu0 0.0
    %172 = vmatpush.msra.mxu0 0.0
    %173 = vmatpush.msra.mxu0 0.0
    %174 = vmatpush.msra.mxu0 0.0
    %175 = vmatpush.msra.mxu0 0.0
    %176 = vmatpush.msra.mxu0 0.0
    %177 = vmatpush.msra.mxu0 0.0
    %178 = vmatpush.msra.mxu0 0.0
    %179 = vmatpush.msra.mxu0 %v161
    %180 = vmatpush.msra.mxu0 %v160
    %181 = vmatpush.msra.mxu0 %v159
    %182 = vmatpush.msra.mxu0 %v158
    %183 = vmatpush.msra.mxu0 %v157
    %184 = vmatmul.f32.gmra.mxu0 %v166
    %v185 = vpop.f32.mrf.mxu0
    %v186 = vadd.f32 %v163, %v185
    %187 = vdwg.mxu0
    %v188 = vmax.f32 %v186, 0.0
    %v189 = vld [vmem:[#allocation2 + $0x78] sm:$0xff]
    %v190 = vld [vmem:[#allocation2 + $0x80] sm:$0xff]
    %v191 = vld [vmem:[#allocation2 + $0x88] sm:$0xff]
    %v192 = vld [vmem:[#allocation2 + $0x90] sm:$0xff]
    %v193 = vld [vmem:[#allocation2 + $0x98] sm:$0x1]
    %v194 = vperm.slane %v193, 0
    %vm195 = vcmask 261120
    %v197 = vsel %vm195, %v188, 0
    %199 = vmatpush.msra.mxu0 0.0
    %200 = vmatpush.msra.mxu0 0.0
    %201 = vmatpush.msra.mxu0 0.0
    %202 = vmatpush.msra.mxu0 0.0
    %203 = vmatpush.msra.mxu0 0.0
    %204 = vmatpush.msra.mxu0 0.0
    %205 = vmatpush.msra.mxu0 0.0
    %206 = vmatpush.msra.mxu0 0.0
    %207 = vmatpush.msra.mxu0 0.0
    %208 = vmatpush.msra.mxu0 0.0
    %209 = vmatpush.msra.mxu0 0.0
    %210 = vmatpush.msra.mxu0 0.0
    %211 = vmatpush.msra.mxu0 %v192
    %212 = vmatpush.msra.mxu0 %v191
    %213 = vmatpush.msra.mxu0 %v190
    %214 = vmatpush.msra.mxu0 %v189
    %215 = vmatmul.f32.gmra.mxu0 %v197
    %v216 = vpop.f32.mrf.mxu0
    %v217 = vadd.f32 %v194, %v216
    %218 = vdwg.mxu0
    %219 = vrot.lane.b32.xlu0 %v98, 16
    %v220 = vpop.permute.xlu0 %219
    %v222 = vsel %vm195, %v217, %v220
    %v223 = vld [vmem:[#allocation2 + $0xa0] sm:$0xff]
    %v224 = vld [vmem:[#allocation2 + $0xa8] sm:$0xff]
    %v225 = vld [vmem:[#allocation2 + $0xb0] sm:$0xff]
    %v226 = vld [vmem:[#allocation2 + $0xb8] sm:$0xff]
    %v227 = vld [vmem:[#allocation2 + $0xc0] sm:$0xff]
    %v228 = vld [vmem:[#allocation2 + $0xc8] sm:$0xff]
    %v229 = vld [vmem:[#allocation2 + $0xd0] sm:$0xff]
    %v230 = vld [vmem:[#allocation2 + $0xd8] sm:$0x1]
    %v231 = vperm.slane %v230, 0
    %vm232 = vcmask 457728
    %v234 = vsel %vm232, %v222, 0
    %236 = vmatpush.msra.mxu0 0.0
    %237 = vmatpush.msra.mxu0 0.0
    %238 = vmatpush.msra.mxu0 0.0
    %239 = vmatpush.msra.mxu0 0.0
    %240 = vmatpush.msra.mxu0 0.0
    %241 = vmatpush.msra.mxu0 0.0
    %242 = vmatpush.msra.mxu0 0.0
    %243 = vmatpush.msra.mxu0 0.0
    %244 = vmatpush.msra.mxu0 0.0
    %245 = vmatpush.msra.mxu0 %v229
    %246 = vmatpush.msra.mxu0 %v228
    %247 = vmatpush.msra.mxu0 %v227
    %248 = vmatpush.msra.mxu0 %v226
    %249 = vmatpush.msra.mxu0 %v225
    %250 = vmatpush.msra.mxu0 %v224
    %251 = vmatpush.msra.mxu0 %v223
    %252 = vmatmul.f32.gmra.mxu0 %v234
    %v253 = vpop.f32.mrf.mxu0
    %v254 = vadd.f32 %v231, %v253
    %255 = vdwg.mxu0
    %v256 = vld [vmem:[#allocation2 + $0xe0] sm:$0xff]
    %v257 = vld [vmem:[#allocation2 + $0xe8] sm:$0xff]
    %v258 = vld [vmem:[#allocation2 + $0xf0] sm:$0xff]
    %v259 = vld [vmem:[#allocation2 + $0xf8] sm:$0xff]
    %v260 = vld [vmem:[#allocation2 + $0x100] sm:$0x1]
    %v261 = vperm.slane %v260, 0
    %v263 = vsel %vm195, %v254, 0
    %265 = vmatpush.msra.mxu0 0.0
    %266 = vmatpush.msra.mxu0 0.0
    %267 = vmatpush.msra.mxu0 0.0
    %268 = vmatpush.msra.mxu0 0.0
    %269 = vmatpush.msra.mxu0 0.0
    %270 = vmatpush.msra.mxu0 0.0
    %271 = vmatpush.msra.mxu0 0.0
    %272 = vmatpush.msra.mxu0 0.0
    %273 = vmatpush.msra.mxu0 0.0
    %274 = vmatpush.msra.mxu0 0.0
    %275 = vmatpush.msra.mxu0 0.0
    %276 = vmatpush.msra.mxu0 0.0
    %277 = vmatpush.msra.mxu0 %v259
    %278 = vmatpush.msra.mxu0 %v258
    %279 = vmatpush.msra.mxu0 %v257
    %280 = vmatpush.msra.mxu0 %v256
    %281 = vmatmul.f32.gmra.mxu0 %v263
    %v282 = vpop.f32.mrf.mxu0
    %v283 = vadd.f32 %v261, %v282
    %284 = vdwg.mxu0
    %286 = vrot.lane.b32.xlu0 %v283, 32
    %v287 = vpop.permute.xlu0 %286
    %v289 = vsel %vm195, %v217, %v287
    %v290 = vld [vmem:[#allocation2 + $0x108] sm:$0xff]
    %v291 = vld [vmem:[#allocation2 + $0x110] sm:$0xff]
    %v292 = vld [vmem:[#allocation2 + $0x118] sm:$0xff]
    %v293 = vld [vmem:[#allocation2 + $0x120] sm:$0xff]
    %v294 = vld [vmem:[#allocation2 + $0x128] sm:$0xff]
    %v295 = vld [vmem:[#allocation2 + $0x130] sm:$0xff]
    %v296 = vld [vmem:[#allocation2 + $0x138] sm:$0xff]
    %v297 = vld [vmem:[#allocation2 + $0x140] sm:$0xff]
    %v298 = vld [vmem:[#allocation2 + $0x148] sm:$0x1]
    %v299 = vperm.slane %v298, 0
    %vm300 = vcmask 523264
    %v302 = vsel %vm300, %v289, 0
    %304 = vmatpush.msra.mxu0 0.0
    %305 = vmatpush.msra.mxu0 0.0
    %306 = vmatpush.msra.mxu0 0.0
    %307 = vmatpush.msra.mxu0 0.0
    %308 = vmatpush.msra.mxu0 0.0
    %309 = vmatpush.msra.mxu0 0.0
    %310 = vmatpush.msra.mxu0 0.0
    %311 = vmatpush.msra.mxu0 0.0
    %312 = vmatpush.msra.mxu0 %v297
    %313 = vmatpush.msra.mxu0 %v296
    %314 = vmatpush.msra.mxu0 %v295
    %315 = vmatpush.msra.mxu0 %v294
    %316 = vmatpush.msra.mxu0 %v293
    %317 = vmatpush.msra.mxu0 %v292
    %318 = vmatpush.msra.mxu0 %v291
    %319 = vmatpush.msra.mxu0 %v290
    %320 = vmatmul.f32.gmra.mxu0 %v302
    %v321 = vpop.f32.mrf.mxu0
    %v322 = vadd.f32 %v299, %v321
    %323 = vdwg.mxu0
    %325 = vset.pattern.permute.xlu0 0
    %326 = vperm.xlu0 %325, %v322
    %v327 = vpop.permute.xlu0 %326
    %v329 = vstv %s156
    %vm330 = vcmp.eq.s32.totalorder %v33, 0
    %vm331 = vcmp.eq.s32.totalorder %v33, 1
    %v332 = vsel %vm331, %v329, 0.0
    %v333 = vsel %vm330, %v327, %v332
    %334 = vst [vmem:[%s3] sm:$0xff] %v333
    // Predicated region
    $region18: #{_lambda_.1} parent=1 // pred_check
      _
    $region19: #{_lambda_.1} parent=1 // pred_check_branch
      %336 = sbr.rel (0) target = $region21
    $region20: #{_lambda_.1} parent=1 // pred_region
      _
    $region21: #{_lambda_.1} parent=1 // pred_fallthru
      _
    // Predicated region
    $region22: #{_lambda_.1} parent=1 // pred_check
      _
    $region23: #{_lambda_.1} parent=1 // pred_check_branch
      %338 = sbr.rel (0) target = $region25
    $region24: #{_lambda_.1} parent=1 // pred_region
      _
    $region25: #{_lambda_.1} parent=1 // pred_fallthru
      _
    %339 = vsyncpa [#allocation3], 1

</llo_original>
